<compile_context>
chip_gen: v5e
topology: v5e:2x2
jax: 0.10.0
libtpu: 0.0.40
codegen_flags: <defaults>
</compile_context>

<pallas_src>
import jax
import jax.numpy as jnp
from jax.experimental import pallas as pl
from jax.experimental.pallas import tpu as pltpu


LANES = 128
ACC_ROWS = 64                                 # 8 vregs per accumulator (ILP-friendly)
SINGLE_BLOCK_MAX_BYTES = 8 * 1024 * 1024      # both inputs together
TILE_BUDGET_BYTES = 16 * 1024 * 1024          # 2 inputs x 2 pipeline buffers
VMEM_LIMIT_BYTES = 32 * 1024 * 1024           # safe scoped limit on v5e/v6e/v7x


def _min_sublanes(dtype):
    """Minimum second-to-last tile dim for a dtype (8 f32, 16 bf16, 32 int8)."""
    bits = jnp.dtype(dtype).itemsize * 8
    return max(8, (32 // bits) * 8)


# ---------------------------------------------------------------------------
# Kernel 1: single invocation — whole (rows, 128) array is one block.
# ---------------------------------------------------------------------------
def _single_block_kernel(ts_ref, d_ref, r_ref, out_ref):
    d = d_ref[...].astype(jnp.float32)
    r = r_ref[...].astype(jnp.float32)
    sp = jnp.sum(d * r)
    sq = jnp.sum(d * d + r * r)
    tc = sp / (sq - sp)
    out_ref[...] = jnp.abs(tc - ts_ref[0]).reshape(1, 1)


# ---------------------------------------------------------------------------
# Kernel 2: tiled reduction over a 1-D grid with large row blocks and small
# vreg-resident accumulators. Per-step work is pure VPU (casts, muls, sublane
# group adds); the cross-lane reduction happens only once, in finalize.
# ---------------------------------------------------------------------------
def _make_tiled_kernel(rows, br, mask_tail):
    def kernel(ts_ref, d_ref, r_ref, out_ref, acc_sp, acc_sq):
        i = pl.program_id(0)

        @pl.when(i == 0)
        def _init():
            acc_sp[...] = jnp.zeros_like(acc_sp)
            acc_sq[...] = jnp.zeros_like(acc_sq)

        d = d_ref[...].astype(jnp.float32)
        r = r_ref[...].astype(jnp.float32)

        if mask_tail:
            # Zero out-of-range rows of the partial last block BEFORE the
            # multiplies so undefined/NaN bits cannot poison the sums.
            row_ids = jax.lax.broadcasted_iota(jnp.int32, (br, LANES), 0) + i * br
            valid = row_ids < rows
            d = jnp.where(valid, d, 0.0)
            r = jnp.where(valid, r, 0.0)

        sp = d * r
        sq = d * d + r * r

        # Fold the (br, 128) tile into (ACC_ROWS, 128) with sublane-group adds
        # (no XLU, no full-tile scratch traffic).
        acc_sp[...] += sp.reshape(-1, ACC_ROWS, LANES).sum(axis=0)
        acc_sq[...] += sq.reshape(-1, ACC_ROWS, LANES).sum(axis=0)

        @pl.when(i == pl.num_programs(0) - 1)
        def _finalize():
            s_sp = jnp.sum(acc_sp[...])
            s_sq = jnp.sum(acc_sq[...])
            tc = s_sp / (s_sq - s_sp)
            out_ref[...] = jnp.abs(tc - ts_ref[0]).reshape(1, 1)

    return kernel


# ---------------------------------------------------------------------------
# Wrapper
# ---------------------------------------------------------------------------
def binding_affinity_and_sim_reference_loss(data, ref, target_sim):
    """Returns a scalar float32 loss = |Tanimoto(data, ref) - target_sim|."""
    assert data.shape == ref.shape, "data and ref must have the same shape"

    d_flat = jnp.ravel(data)   # layout no-op for contiguous inputs
    r_flat = jnp.ravel(ref)    # keep NATIVE dtype; f32 cast happens in-kernel
    n = d_flat.shape[0]

    # Align the flat length to a lane/sublane-tile multiple. For typical
    # fingerprint lengths (multiples of 128) this is a no-op; otherwise the
    # pad is at most `gran - 1` (< 4096) zeros, which do not change any sum.
    sub = max(_min_sublanes(d_flat.dtype), _min_sublanes(r_flat.dtype))
    gran = sub * LANES
    n_pad = -(-n // gran) * gran
    if n_pad != n:
        d_flat = jnp.pad(d_flat, (0, n_pad - n))
        r_flat = jnp.pad(r_flat, (0, n_pad - n))

    rows = n_pad // LANES
    d2 = d_flat.reshape(rows, LANES)
    r2 = r_flat.reshape(rows, LANES)

    bytes_per_row = LANES * (d2.dtype.itemsize + r2.dtype.itemsize)
    total_bytes = rows * bytes_per_row

    ts = jnp.asarray(target_sim, dtype=jnp.float32).reshape(1)

    if total_bytes <= SINGLE_BLOCK_MAX_BYTES:
        # Small/medium input: one full-array block, no grid pipelining.
        kernel = _single_block_kernel
        grid_spec = pltpu.PrefetchScalarGridSpec(
            num_scalar_prefetch=1,
            grid=(1,),
            in_specs=[
                pl.BlockSpec((rows, LANES), lambda i, ts: (0, 0)),
                pl.BlockSpec((rows, LANES), lambda i, ts: (0, 0)),
            ],
            out_specs=pl.BlockSpec((1, 1), lambda i, ts: (0, 0)),
        )
    else:
        # Tiled reduction: size BR so double-buffered input tiles fit the
        # budget (f32: 8192 rows = 4 MiB/tile/input; bf16: 16384 rows).
        br = TILE_BUDGET_BYTES // (2 * bytes_per_row)
        br = max(512, min(32768, (br // 512) * 512))
        num_tiles = pl.cdiv(rows, br)
        mask_tail = (rows % br) != 0

        kernel = _make_tiled_kernel(rows, br, mask_tail)
        grid_spec = pltpu.PrefetchScalarGridSpec(
            num_scalar_prefetch=1,
            grid=(num_tiles,),
            in_specs=[
                pl.BlockSpec((br, LANES), lambda i, ts: (i, 0)),
                pl.BlockSpec((br, LANES), lambda i, ts: (i, 0)),
            ],
            out_specs=pl.BlockSpec((1, 1), lambda i, ts: (0, 0)),
            scratch_shapes=[
                pltpu.VMEM((ACC_ROWS, LANES), jnp.float32),   # sum(d*r) partials
                pltpu.VMEM((ACC_ROWS, LANES), jnp.float32),   # sum(d*d + r*r) partials
            ],
        )

    out = pl.pallas_call(
        kernel,
        out_shape=jax.ShapeDtypeStruct((1, 1), jnp.float32),
        grid_spec=grid_spec,
        compiler_params=pltpu.CompilerParams(
            dimension_semantics=("arbitrary",),          # carried reduction axis
            vmem_limit_bytes=VMEM_LIMIT_BYTES),
    )(ts, d2, r2)

    return out.reshape(())   # scalar, matching torch's 0-d loss tensor


def _reference_loss(data, ref, target_sim):
    d = jnp.ravel(data).astype(jnp.float32)
    r = jnp.ravel(ref).astype(jnp.float32)
    sp = jnp.sum(d * r)
    tc = sp / (jnp.sum(d * d) + jnp.sum(r * r) - sp)
    return jnp.abs(tc - jnp.float32(target_sim))


if __name__ == "__main__":
    key = jax.random.PRNGKey(0)
    k1, k2, k3, k4 = jax.random.split(key, 4)
    target_sim = jnp.float32(0.75)

    # 1) typical fingerprint-sized f32 vector (single-block path, no padding)
    N_small = 2048
    d_s = jax.random.uniform(k1, (N_small,), dtype=jnp.float32)
    r_s = jax.random.uniform(k2, (N_small,), dtype=jnp.float32)
    loss_s = binding_affinity_and_sim_reference_loss(d_s, r_s, target_sim)
    jax.block_until_ready(loss_s)
    exp_s = _reference_loss(d_s, r_s, target_sim)
    assert jnp.allclose(loss_s, exp_s, rtol=2e-5, atol=1e-6), (loss_s, exp_s)

    # 2) mixed dtypes (data bf16, ref f32): no wrapper-side downcast of ref,
    #    both cast to f32 inside the kernel (matches the promoted reference).
    d_b = d_s.astype(jnp.bfloat16)
    loss_b = binding_affinity_and_sim_reference_loss(d_b, r_s, target_sim)
    jax.block_until_ready(loss_b)
    exp_b = _reference_loss(d_b, r_s, target_sim)
    assert jnp.allclose(loss_b, exp_b, rtol=1e-4, atol=1e-5), (loss_b, exp_b)

    # 3) larger, non-aligned length: tiled path + partial last block masking
    N_big = 2_000_003
    d_l = jax.random.uniform(k3, (N_big,), dtype=jnp.float32)
    r_l = jax.random.uniform(k4, (N_big,), dtype=jnp.float32)
    loss_l = binding_affinity_and_sim_reference_loss(d_l, r_l, target_sim)
    jax.block_until_ready(loss_l)
    exp_l = _reference_loss(d_l, r_l, target_sim)
    assert jnp.allclose(loss_l, exp_l, rtol=5e-5, atol=1e-5), (loss_l, exp_l)

    print("KERNEL_OK")
</pallas_src>

<mosaic_0001>
module attributes {stable_mosaic.version = 11 : i64} {
  func.func @_single_block_kernel(%arg0: i32, %arg1: memref<1xf32, #tpu.memory_space<smem>>, %arg2: memref<16x128xf32, #tpu.memory_space<vmem>>, %arg3: memref<16x128xf32, #tpu.memory_space<vmem>>, %arg4: memref<1x1xf32, #tpu.memory_space<vmem>>) attributes {dimension_semantics = [#tpu.dimension_semantics<arbitrary>], iteration_bounds = array<i64: 1>, scalar_prefetch = 1 : i64, scratch_operands = 0 : i64, tpu.core_type = #tpu.core_type<tc>, window_params = [{pipeline_mode = #tpu.pipeline_mode<synchronous>, transform_indices = @transform_0, window_bounds = array<i64: 16, 128>}, {pipeline_mode = #tpu.pipeline_mode<synchronous>, transform_indices = @transform_1, window_bounds = array<i64: 16, 128>}, {pipeline_mode = #tpu.pipeline_mode<synchronous>, transform_indices = @transform_2, window_bounds = array<i64: 1, 1>}]} {
    %c0 = arith.constant 0 : index
    %c0_0 = arith.constant 0 : index
    %0 = vector.load %arg2[%c0, %c0_0] : memref<16x128xf32, #tpu.memory_space<vmem>>, vector<16x128xf32>
    %c0_1 = arith.constant 0 : index
    %c0_2 = arith.constant 0 : index
    %1 = vector.load %arg3[%c0_1, %c0_2] : memref<16x128xf32, #tpu.memory_space<vmem>>, vector<16x128xf32>
    %2 = arith.mulf %0, %1 : vector<16x128xf32>
    %3 = vector.shape_cast %2 : vector<16x128xf32> to vector<1x16x128xf32>
    %cst = arith.constant dense<0.000000e+00> : vector<1xf32>
    %4 = vector.multi_reduction <add>, %3, %cst [1, 2] : vector<1x16x128xf32> to vector<1xf32>
    %5 = vector.shape_cast %4 : vector<1xf32> to vector<1x1x1xf32>
    %6 = vector.extract %5[0, 0, 0] : f32 from vector<1x1x1xf32>
    %7 = arith.mulf %0, %0 : vector<16x128xf32>
    %8 = arith.mulf %1, %1 : vector<16x128xf32>
    %9 = arith.addf %7, %8 : vector<16x128xf32>
    %10 = vector.shape_cast %9 : vector<16x128xf32> to vector<1x16x128xf32>
    %cst_3 = arith.constant dense<0.000000e+00> : vector<1xf32>
    %11 = vector.multi_reduction <add>, %10, %cst_3 [1, 2] : vector<1x16x128xf32> to vector<1xf32>
    %12 = vector.shape_cast %11 : vector<1xf32> to vector<1x1x1xf32>
    %13 = vector.extract %12[0, 0, 0] : f32 from vector<1x1x1xf32>
    %14 = arith.subf %13, %6 : f32
    %15 = arith.divf %6, %14 : f32
    %c0_4 = arith.constant 0 : index
    %16 = memref.load %arg1[%c0_4] : memref<1xf32, #tpu.memory_space<smem>>
    %17 = arith.subf %15, %16 : f32
    %18 = math.absf %17 : f32
    %19 = vector.broadcast %18 : f32 to vector<1x1xf32>
    %c0_5 = arith.constant 0 : index
    %c0_6 = arith.constant 0 : index
    %20 = vector.load %arg4[%c0_5, %c0_6] : memref<1x1xf32, #tpu.memory_space<vmem>>, vector<1x1xf32>
    tpu.vector_store %arg4[%c0_5, %c0_6], %19 {strides = array<i32>} : memref<1x1xf32, #tpu.memory_space<vmem>>, vector<1x1xf32>,
    return
  }
  func.func @transform_0(%arg0: i32, %arg1: memref<1xf32, #tpu.memory_space<smem>>) -> (i32, i32) {
    %c0_i32 = arith.constant 0 : i32
    %c0_i32_0 = arith.constant 0 : i32
    %c0_i32_1 = arith.constant 0 : i32
    return %c0_i32, %c0_i32_0 : i32, i32
  }
  func.func @transform_1(%arg0: i32, %arg1: memref<1xf32, #tpu.memory_space<smem>>) -> (i32, i32) {
    %c0_i32 = arith.constant 0 : i32
    %c0_i32_0 = arith.constant 0 : i32
    %c0_i32_1 = arith.constant 0 : i32
    return %c0_i32, %c0_i32_0 : i32, i32
  }
  func.func @transform_2(%arg0: i32, %arg1: memref<1xf32, #tpu.memory_space<smem>>) -> (i32, i32) {
    %c0_i32 = arith.constant 0 : i32
    %c0_i32_0 = arith.constant 0 : i32
    %c0_i32_1 = arith.constant 0 : i32
    return %c0_i32, %c0_i32_0 : i32, i32
  }
}

</mosaic_0001>

<llo_original>
// kernel: tpu_custom_call.1
$region0: #{tpu_custom_call.1}
  #allocation0 [shape = 'u32[]', space=smem, size = 0x4, offset = 0x4, fixed_abs, tag = 'smem constant byte address 0x4 - core index']
  #allocation1 [shape = 'u32[72,128]{1,0:T(1,128)}', space=vmem, size = 0x9000, scoped, tag = 'internal scratch']
  #allocation2 [shape = 's32[1]{0}', space=sflag, size = 0x4, scoped, tag = 'scoped memory for tpu_custom_call.1']
  #allocation3 [shape = 'f32[1]{0:T(128)S(6)}', space=smem, size = 0x200, scoped, tag = 'prefetched SMEM operand 0']
  %s0 = inlined_call_operand.<no memory space> [shape: f32[1], index: 0, kind: input, shape index: {}]
  %s1 = inlined_call_operand.hbm [shape: f32[16,128], index: 1, kind: input, shape index: {}]
  %s2 = inlined_call_operand.hbm [shape: f32[16,128], index: 2, kind: input, shape index: {}]
  %s3 = inlined_call_operand.hbm [shape: f32[1,1], index: 3, kind: output, shape index: {}]
  %s4 = sld [smem:[#allocation0]]
  $region26: #{tpu_custom_call.1} parent=0
    _
  %s6 = ssub.s32 1, %s4
  %s7 = scalar_select 0, %s6, %s4
  %8 = sst [smem:[#allocation3]] %s0
  $region1: #{tpu_custom_call.1} parent=0
    #allocation4 [shape = 'u8[8192]{0}', space=vmem, size = 0x2000, scoped, tag = 'input window, operand 1, single buffered']
    #allocation5 [shape = 's32[1]{0}', space=sflag, size = 0x4, scoped, tag = 'scoped memory for tpu_custom_call.1']
    #allocation6 [shape = 's32[1]{0}', space=sflag, size = 0x4, scoped, tag = 'scoped memory for tpu_custom_call.1']
    #allocation7 [shape = 'u8[8192]{0}', space=vmem, size = 0x2000, scoped, tag = 'input window, operand 2, single buffered']
    #allocation8 [shape = 's32[1]{0}', space=sflag, size = 0x4, scoped, tag = 'scoped memory for tpu_custom_call.1']
    #allocation9 [shape = 'u8[512]{0}', space=vmem, size = 0x400, scoped, tag = 'output window, operand 0, single buffered']
    %9 = vsyncpa [#allocation5], 0
    %10 = vsyncpa [#allocation8], 0
    %11 = vsyncpa [#allocation6], 0
    // Predicated region
    $region2: #{tpu_custom_call.1} parent=1 // pred_check
      _
    $region3: #{tpu_custom_call.1} parent=1 // pred_check_branch
      %13 = sbr.rel (0) target = $region5
    $region4: #{tpu_custom_call.1} parent=1 // pred_region
      %15 = vsyncadd [#allocation5], 0
      %s16 = sshll.u32 %s1, 4
      %s17 = int_to_ptr.hbm [resolvable:$true] %s16
      %s18 = sshll.u32 [#allocation4], 4
      %s19 = int_to_ptr.vmem [resolvable:$true] %s18
      %24 = dma.hbm_to_vmem [thread:$0]  %s17, 256, %s19, [#allocation5], 128, 128, 8
    $region5: #{tpu_custom_call.1} parent=1 // pred_fallthru
      _
    // Predicated region
    $region6: #{tpu_custom_call.1} parent=1 // pred_check
      _
    $region7: #{tpu_custom_call.1} parent=1 // pred_check_branch
      %26 = sbr.rel (0) target = $region9
    $region8: #{tpu_custom_call.1} parent=1 // pred_region
      %28 = vsyncadd [#allocation8], 0
      %s29 = sshll.u32 %s2, 4
      %s30 = int_to_ptr.hbm [resolvable:$true] %s29
      %s31 = sshll.u32 [#allocation7], 4
      %s32 = int_to_ptr.vmem [resolvable:$true] %s31
      %37 = dma.hbm_to_vmem [thread:$0]  %s30, 256, %s32, [#allocation8], 128, 128, 8
    $region9: #{tpu_custom_call.1} parent=1 // pred_fallthru
      _
    // Predicated region
    $region10: #{tpu_custom_call.1} parent=1 // pred_check
      _
    $region11: #{tpu_custom_call.1} parent=1 // pred_check_branch
      %39 = sbr.rel (0) target = $region13
    $region12: #{tpu_custom_call.1} parent=1 // pred_region
      %41 = dma.done [#allocation5], 256
    $region13: #{tpu_custom_call.1} parent=1 // pred_fallthru
      _
    // Predicated region
    $region14: #{tpu_custom_call.1} parent=1 // pred_check
      _
    $region15: #{tpu_custom_call.1} parent=1 // pred_check_branch
      %43 = sbr.rel (0) target = $region17
    $region16: #{tpu_custom_call.1} parent=1 // pred_region
      %45 = dma.done [#allocation8], 256
    $region17: #{tpu_custom_call.1} parent=1 // pred_fallthru
      _
    %v46 = vld [vmem:[#allocation4] sm:$0xff]
    %v47 = vld [vmem:[#allocation4 + $0x8] sm:$0xff]
    %v48 = vld [vmem:[#allocation7] sm:$0xff]
    %v49 = vld [vmem:[#allocation7 + $0x8] sm:$0xff]
    %v50 = vmul.f32 %v46, %v48
    %v51 = vmul.f32 %v47, %v49
    %v52 = vadd.f32 %v50, %v51
    %53 = vadd.xlane.f32.xlu0 %v52
    %v54 = vpop.xlane.xlu0 %53
    %v55 = vrot.slane %v54, 4
    %v56 = vadd.f32 %v54, %v55
    %v57 = vrot.slane %v56, 2
    %v58 = vadd.f32 %v56, %v57
    %v59 = vrot.slane %v58, 1
    %v60 = vadd.f32 %v58, %v59
    %s61 = vtos %v60
    %v62 = vmul.f32 %v46, %v46
    %v63 = vmul.f32 %v47, %v47
    %v64 = vmul.f32 %v48, %v48
    %v65 = vmul.f32 %v49, %v49
    %v66 = vadd.f32 %v62, %v64
    %v67 = vadd.f32 %v63, %v65
    %v68 = vadd.f32 %v66, %v67
    %69 = vadd.xlane.f32.xlu0 %v68
    %v70 = vpop.xlane.xlu0 %69
    %v71 = vrot.slane %v70, 4
    %v72 = vadd.f32 %v70, %v71
    %v73 = vrot.slane %v72, 2
    %v74 = vadd.f32 %v72, %v73
    %v75 = vrot.slane %v74, 1
    %v76 = vadd.f32 %v74, %v75
    %s77 = vtos %v76
    %s78 = ssub.f32 %s77, %s61
    %v79 = vstv %s78
    %v80 = vrcp.pop %v79
    %v81 = vmul.f32 %v79, %v80
    %v82 = vsub.f32 1.0, %v81
    %v83 = vmul.f32 %v80, %v82
    %v84 = vadd.f32 %v80, %v83
    %vm85 = vweird.f32 %v79
    %vm86 = vweird.f32 %v80
    %vm87 = vmor %vm85, %vm86
    %v88 = vsel %vm87, %v80, %v84
    %v89 = vand.u32 2147483647, %v79
    %vm90 = vcmp.eq.f32.partialorder %v89, 8.507059e+37
    %v91 = vand.u32 %v79, 2147483648
    %v92 = vor.u32 1.1754944e-38, %v91
    %v93 = vsel %vm90, %v92, %v88
    %s94 = vtos %v93
    %s95 = smul.f32 %s61, %s94
    %s96 = sld [smem:[#allocation3]]
    %s97 = ssub.f32 %s95, %s96
    %s98 = sand.u32 2147483647, %s97
    %v99 = vstv %s98
    %vm100 = vcmask 0
    %101 = vst.msk [vmem:[#allocation9] sm:$0x1] %vm100, %v99
    // Predicated region
    $region18: #{tpu_custom_call.1} parent=1 // pred_check
      _
    $region19: #{tpu_custom_call.1} parent=1 // pred_check_branch
      %103 = sbr.rel (0) target = $region21
    $region20: #{tpu_custom_call.1} parent=1 // pred_region
      %105 = vsyncadd [#allocation6], 0
      %s107 = sshll.u32 [#allocation9], 4
      %s108 = int_to_ptr.vmem [resolvable:$true] %s107
      %s109 = sshll.u32 %s3, 4
      %s110 = int_to_ptr.hbm [resolvable:$true] %s109
      %112 = dma.vmem_to_hbm [thread:$0]  %s108, 16, %s110, [#allocation6]
    $region21: #{tpu_custom_call.1} parent=1 // pred_fallthru
      _
    // Predicated region
    $region22: #{tpu_custom_call.1} parent=1 // pred_check
      _
    $region23: #{tpu_custom_call.1} parent=1 // pred_check_branch
      %114 = sbr.rel (0) target = $region25
    $region24: #{tpu_custom_call.1} parent=1 // pred_region
      %116 = dma.done [#allocation6], 16
    $region25: #{tpu_custom_call.1} parent=1 // pred_fallthru
      _
    %117 = vsyncpa [#allocation5], 1
    %118 = vsyncpa [#allocation8], 1
    %119 = vsyncpa [#allocation6], 1

</llo_original>
